<compile_context>
chip_gen: v7x
topology: tpu7x:2x2x1
jax: 0.10.0
libtpu: 0.0.40
codegen_flags: <defaults>
</compile_context>

<pallas_src>
import jax
import jax.numpy as jnp
from jax.experimental import pallas as pl
from jax.experimental.pallas import tpu as pltpu

INFINITY_NUMBER = 1e12
PAD_ID = 0


def _round_up(x, m):
    return ((x + m - 1) // m) * m


def _gcn_rel_kernel(h_ref, madd_ref, w1a_ref, w1b_ref, b1_ref, w2_ref, b2_ref,
                    out_ref, mh_ref, ma_ref):
    # h:    [TB, TT, D] bf16 embedding tile (one sequence chunk)
    # madd: [TB, 2, TT] f32 additive masks (0 keep / -1e12 drop); [:,0]=pool, [:,1]=acronym
    t = pl.program_id(1)

    @pl.when(t == 0)
    def _init():
        mh_ref[...] = jnp.full(mh_ref.shape, -jnp.inf, jnp.float32)
        ma_ref[...] = jnp.full(ma_ref.shape, -jnp.inf, jnp.float32)

    h = h_ref[...].astype(jnp.float32)                 # [TB, TT, D]
    m = madd_ref[...]                                  # [TB, 2, TT]
    pm = m[:, 0, :][:, :, None]                        # [TB, TT, 1]
    am = m[:, 1, :][:, :, None]                        # [TB, TT, 1]

    # Running max over the sequence axis (chunked masked max-pool).
    mh_ref[...] = jnp.maximum(mh_ref[...], jnp.max(h + pm, axis=1))
    ma_ref[...] = jnp.maximum(ma_ref[...], jnp.max(h + am, axis=1))

    @pl.when(t == pl.num_programs(1) - 1)
    def _finalize():
        # First Linear with the concat folded away:
        #   cat([h_out, a_out], 1) @ W1 + b1 == h_out @ W1[:D] + a_out @ W1[D:] + b1
        x = (jnp.dot(mh_ref[...], w1a_ref[...], preferred_element_type=jnp.float32)
             + jnp.dot(ma_ref[...], w1b_ref[...], preferred_element_type=jnp.float32)
             + b1_ref[...])
        x = jnp.maximum(x, 0.0)
        # Second Linear + ReLU (mlp_layers == 2).
        x = jnp.dot(x, w2_ref[...], preferred_element_type=jnp.float32) + b2_ref[...]
        out_ref[...] = jnp.maximum(x, 0.0)             # [TB, H_pad] lane-dense store


def _vmem_capacity_bytes():
    try:
        return int(pltpu.get_tpu_info().vmem_capacity_bytes)
    except Exception:
        return 64 * 1024 * 1024            # conservative (v7x-sized) fallback


def _pick_tiles(B, T, D, H_pad):
    """Generation-aware batch/sequence tile selection + VMEM limit."""
    vmem_cap = _vmem_capacity_bytes()
    budget = int(vmem_cap * 0.45)          # headroom for compiler scratch / spills

    # Sequence tile: keep the whole sequence per step unless it is long.
    T_TILE = 512
    if T <= T_TILE:
        T_pad, TT = T, T
    else:
        T_pad = _round_up(T, T_TILE)
        TT = T_TILE

    # Weights/biases stay VMEM-resident (constant index maps); count both buffers.
    # TODO(synk): pipeline_mode=pl.Buffered(1) on the weight specs would drop the
    # second buffer near the v7x VMEM ceiling.
    weights = 2 * (2 * D * H_pad + H_pad * H_pad + 2 * H_pad) * 4

    def footprint(tb):
        h_tile = 2 * tb * TT * D * 2       # bf16 h stream, double-buffered
        m_tile = 2 * tb * 2 * TT * 4       # additive masks, double-buffered
        o_tile = 2 * tb * H_pad * 4        # output tile, double-buffered
        scratch = 2 * tb * D * 4           # running-max accumulators
        return weights + h_tile + m_tile + o_tile + scratch

    B8 = _round_up(max(B, 1), 8)
    tb = max(8, min(512, (B8 // 8) * 8))
    while tb > 8 and footprint(tb) > budget:
        tb -= 8
    # Keep >= 2 batch grid steps when possible so the "parallel" axis can be
    # split across v7x's two TensorCores (no-op on single-TC v5e/v6e).
    if B8 >= 16:
        tb = min(tb, max(8, ((B8 // 2) // 8) * 8))

    vmem_limit = min(int(vmem_cap * 0.75), 100 * 1024 * 1024)
    return tb, TT, T_pad, vmem_limit


def gcn_relation_forward(words, masks, acronym, params):
    """JAX wrapper: embedding gather (glue) + gridded Pallas kernel (pool + MLP)."""
    emb_table = params["emb"].astype(jnp.bfloat16)   # stream h in bf16: halves HBM bytes
    w1, b1 = params["w1"], params["b1"]              # [2D, H], [1, H]
    w2, b2 = params["w2"], params["b2"]              # [H, H],  [1, H]

    # Embedding lookup (glue; gather done by XLA).
    # TODO(synk): fully fuse the gather (scalar-prefetched ids + per-row DMA from an
    # HBM-resident table).  At D=128 each embedding row is only 512 B, so per-token
    # DMA descriptor overhead would exceed the cost of re-reading the (now bf16)
    # h stream; the fused gather only pays off for much wider embedding rows.
    h = jnp.take(emb_table, words, axis=0)           # [B, T, D] bf16

    B, T, D = h.shape
    H = w1.shape[1]
    assert w1.shape[0] == 2 * D, "emb_dim must equal 2*hidden_dim for out_mlp input"

    # Pad hidden dim to a multiple of 128 for lane-dense MXU output / stores.
    H_pad = max(128, _round_up(H, 128))
    w1p = jnp.pad(w1, ((0, 0), (0, H_pad - H))).astype(jnp.float32)
    b1p = jnp.pad(b1, ((0, 0), (0, H_pad - H))).astype(jnp.float32)
    w2p = jnp.pad(w2, ((0, H_pad - H), (0, H_pad - H))).astype(jnp.float32)
    b2p = jnp.pad(b2, ((0, 0), (0, H_pad - H))).astype(jnp.float32)
    w1a, w1b = w1p[:D], w1p[D:]                      # concat never materializes

    TB, TT, T_pad, vmem_limit = _pick_tiles(B, T, D, H_pad)
    B_pad = _round_up(B, TB)

    # Precompute the additive masks once in the wrapper (single merged stream).
    neg = jnp.float32(-INFINITY_NUMBER)
    p_add = jnp.where(masks != 0, neg, jnp.float32(0.0))
    a_add = jnp.where(acronym != 0, neg, jnp.float32(0.0))
    madd = jnp.stack([p_add, a_add], axis=1).astype(jnp.float32)   # [B, 2, T]

    if T_pad != T:
        h = jnp.pad(h, ((0, 0), (0, T_pad - T), (0, 0)))
        # padded sequence positions must never win the max-pool
        madd = jnp.pad(madd, ((0, 0), (0, 0), (0, T_pad - T)),
                       constant_values=-INFINITY_NUMBER)
    if B_pad != B:
        h = jnp.pad(h, ((0, B_pad - B), (0, 0), (0, 0)))
        madd = jnp.pad(madd, ((0, B_pad - B), (0, 0), (0, 0)))

    grid = (B_pad // TB, T_pad // TT)

    out = pl.pallas_call(
        _gcn_rel_kernel,
        out_shape=jax.ShapeDtypeStruct((B_pad, H_pad), jnp.float32),
        grid=grid,
        in_specs=[
            pl.BlockSpec((TB, TT, D), lambda b, t: (b, t, 0)),     # h tile (pipelined)
            pl.BlockSpec((TB, 2, TT), lambda b, t: (b, 0, t)),     # additive masks
            pl.BlockSpec((D, H_pad), lambda b, t: (0, 0)),         # W1[:D]  (resident)
            pl.BlockSpec((D, H_pad), lambda b, t: (0, 0)),         # W1[D:]  (resident)
            pl.BlockSpec((1, H_pad), lambda b, t: (0, 0)),         # b1      (resident)
            pl.BlockSpec((H_pad, H_pad), lambda b, t: (0, 0)),     # W2      (resident)
            pl.BlockSpec((1, H_pad), lambda b, t: (0, 0)),         # b2      (resident)
        ],
        out_specs=pl.BlockSpec((TB, H_pad), lambda b, t: (b, 0)),
        scratch_shapes=[
            pltpu.VMEM((TB, D), jnp.float32),        # running max (pool mask)
            pltpu.VMEM((TB, D), jnp.float32),        # running max (acronym mask)
        ],
        compiler_params=pltpu.CompilerParams(
            dimension_semantics=("parallel", "arbitrary"),   # batch megacore / seq reduce
            vmem_limit_bytes=vmem_limit,
        ),
    )(h, madd, w1a, w1b, b1p, w2p, b2p)

    return out[:B, :H]


def init_params(key, vocab_size, emb_dim, hidden_dim):
    """Deterministic parameter init mirroring the module's __init__ shapes."""
    k_emb, k_w1, k_b1, k_w2, k_b2 = jax.random.split(key, 5)

    # nn.Embedding(vocab_size, emb_dim, padding_idx=PAD_ID); rows [1:] ~ U(-1,1), row 0 = 0.
    emb = jax.random.uniform(k_emb, (vocab_size, emb_dim), jnp.float32, -1.0, 1.0)
    emb = emb.at[PAD_ID].set(0.0)

    in_dim = hidden_dim * 2 * 2          # opt['hidden_dim'] * 2 * 2
    lim1 = 1.0 / jnp.sqrt(in_dim)
    lim2 = 1.0 / jnp.sqrt(hidden_dim)
    # stored as [in, out] so the kernel does x @ W + b
    w1 = jax.random.uniform(k_w1, (in_dim, hidden_dim), jnp.float32, -lim1, lim1)
    b1 = jax.random.uniform(k_b1, (1, hidden_dim), jnp.float32, -lim1, lim1)
    w2 = jax.random.uniform(k_w2, (hidden_dim, hidden_dim), jnp.float32, -lim2, lim2)
    b2 = jax.random.uniform(k_b2, (1, hidden_dim), jnp.float32, -lim2, lim2)
    return {"emb": emb, "w1": w1, "b1": b1, "w2": w2, "b2": b2}


def _reference_forward(words, masks, acronym, params):
    """Pure-JAX reference mirroring the PyTorch forward.

    Uses the same bf16-rounded embedding table the kernel streams (the kernel's
    declared I/O contract); everything else is f32, matching the module math.
    """
    emb = params["emb"].astype(jnp.bfloat16).astype(jnp.float32)
    h = jnp.take(emb, words, axis=0)
    neg = jnp.float32(-INFINITY_NUMBER)
    pm = (masks != 0)[:, :, None]
    am = (acronym != 0)[:, :, None]
    h_out = jnp.max(jnp.where(pm, neg, h), axis=1)
    a_out = jnp.max(jnp.where(am, neg, h), axis=1)
    cat = jnp.concatenate([h_out, a_out], axis=1)
    x = jnp.maximum(cat @ params["w1"] + params["b1"], 0.0)
    x = jnp.maximum(x @ params["w2"] + params["b2"], 0.0)
    return x


if __name__ == "__main__":
    # emb_dim must equal 2*hidden_dim so cat([h_out, acronym_out]) has width
    # hidden_dim*2*2 expected by out_mlp.  mlp_layers = 2, pooling = 'max'.
    B, T = 16, 16
    hidden_dim = 64
    emb_dim = 2 * hidden_dim             # 128
    vocab_size = 100

    key = jax.random.PRNGKey(0)
    k_params, k_words = jax.random.split(key, 2)

    params = init_params(k_params, vocab_size, emb_dim, hidden_dim)

    # words: token ids; last 3 positions of each row are PAD.
    words = jax.random.randint(k_words, (B, T), 1, vocab_size, dtype=jnp.int32)
    words = words.at[:, T - 3:].set(PAD_ID)
    # masks: 1 at pad positions (masked out of pooling), 0 elsewhere.
    masks = (words == PAD_ID).astype(jnp.int32)
    # acronym markers: nonzero at a couple of positions per row (masked out of acronym pool).
    acronym = jnp.zeros((B, T), jnp.int32).at[:, 1].set(1).at[:, 4].set(1)

    out = jax.block_until_ready(gcn_relation_forward(words, masks, acronym, params))
    assert out.shape == (B, hidden_dim) and out.dtype == jnp.float32

    ref = jax.block_until_ready(_reference_forward(words, masks, acronym, params))
    assert jnp.allclose(out, ref, rtol=1e-4, atol=1e-4), "kernel mismatch vs reference"

    print("KERNEL_OK")
</pallas_src>

<mosaic_0001>
module attributes {stable_mosaic.version = 11 : i64} {
  func.func @_gcn_rel_kernel(%arg0: i32, %arg1: i32, %arg2: memref<8x16x128xbf16, #tpu.memory_space<vmem>>, %arg3: memref<8x2x16xf32, #tpu.memory_space<vmem>>, %arg4: memref<128x128xf32, #tpu.memory_space<vmem>>, %arg5: memref<128x128xf32, #tpu.memory_space<vmem>>, %arg6: memref<1x128xf32, #tpu.memory_space<vmem>>, %arg7: memref<128x128xf32, #tpu.memory_space<vmem>>, %arg8: memref<1x128xf32, #tpu.memory_space<vmem>>, %arg9: memref<8x128xf32, #tpu.memory_space<vmem>>, %arg10: memref<8x128xf32, #tpu.memory_space<vmem>>, %arg11: memref<8x128xf32, #tpu.memory_space<vmem>>) attributes {dimension_semantics = [#tpu.dimension_semantics<parallel>, #tpu.dimension_semantics<arbitrary>], iteration_bounds = array<i64: 2, 1>, scalar_prefetch = 0 : i64, scratch_operands = 2 : i64, tpu.core_type = #tpu.core_type<tc>, window_params = [{transform_indices = @transform_0, window_bounds = array<i64: 8, 16, 128>}, {transform_indices = @transform_1, window_bounds = array<i64: 8, 2, 16>}, {pipeline_mode = #tpu.pipeline_mode<synchronous>, transform_indices = @transform_2, window_bounds = array<i64: 128, 128>}, {pipeline_mode = #tpu.pipeline_mode<synchronous>, transform_indices = @transform_3, window_bounds = array<i64: 128, 128>}, {pipeline_mode = #tpu.pipeline_mode<synchronous>, transform_indices = @transform_4, window_bounds = array<i64: 1, 128>}, {pipeline_mode = #tpu.pipeline_mode<synchronous>, transform_indices = @transform_5, window_bounds = array<i64: 128, 128>}, {pipeline_mode = #tpu.pipeline_mode<synchronous>, transform_indices = @transform_6, window_bounds = array<i64: 1, 128>}, {transform_indices = @transform_7, window_bounds = array<i64: 8, 128>}]} {
    %c0_i32 = arith.constant 0 : i32
    %0 = arith.cmpi eq, %arg1, %c0_i32 : i32
    %1 = arith.extui %0 : i1 to i32
    %c0_i32_0 = arith.constant 0 : i32
    %2 = arith.cmpi ne, %1, %c0_i32_0 : i32
    scf.if %2 {
      %cst_17 = arith.constant 0xFF800000 : f32
      %27 = vector.broadcast %cst_17 : f32 to vector<8x128xf32>
      %c0_18 = arith.constant 0 : index
      %c0_19 = arith.constant 0 : index
      %28 = vector.load %arg10[%c0_18, %c0_19] : memref<8x128xf32, #tpu.memory_space<vmem>>, vector<8x128xf32>
      tpu.vector_store %arg10[%c0_18, %c0_19], %27 {strides = array<i32>} : memref<8x128xf32, #tpu.memory_space<vmem>>, vector<8x128xf32>,
      %cst_20 = arith.constant 0xFF800000 : f32
      %29 = vector.broadcast %cst_20 : f32 to vector<8x128xf32>
      %c0_21 = arith.constant 0 : index
      %c0_22 = arith.constant 0 : index
      %30 = vector.load %arg11[%c0_21, %c0_22] : memref<8x128xf32, #tpu.memory_space<vmem>>, vector<8x128xf32>
      tpu.vector_store %arg11[%c0_21, %c0_22], %29 {strides = array<i32>} : memref<8x128xf32, #tpu.memory_space<vmem>>, vector<8x128xf32>,
    } else {
    }
    %c0 = arith.constant 0 : index
    %c0_1 = arith.constant 0 : index
    %c0_2 = arith.constant 0 : index
    %3 = vector.load %arg2[%c0, %c0_1, %c0_2] : memref<8x16x128xbf16, #tpu.memory_space<vmem>>, vector<8x16x128xbf16>
    %4 = arith.extf %3 : vector<8x16x128xbf16> to vector<8x16x128xf32>
    %c0_3 = arith.constant 0 : index
    %c0_4 = arith.constant 0 : index
    %c0_5 = arith.constant 0 : index
    %5 = vector.load %arg3[%c0_3, %c0_4, %c0_5] : memref<8x2x16xf32, #tpu.memory_space<vmem>>, vector<8x2x16xf32>
    %6 = vector.extract_strided_slice %5 {offsets = [0, 0, 0], sizes = [8, 1, 16], strides = [1, 1, 1]} : vector<8x2x16xf32> to vector<8x1x16xf32>
    %7 = vector.shape_cast %6 : vector<8x1x16xf32> to vector<8x16xf32>
    %8 = vector.shape_cast %7 : vector<8x16xf32> to vector<8x16x1xf32>
    %9 = vector.extract_strided_slice %5 {offsets = [0, 1, 0], sizes = [8, 1, 16], strides = [1, 1, 1]} : vector<8x2x16xf32> to vector<8x1x16xf32>
    %10 = vector.shape_cast %9 : vector<8x1x16xf32> to vector<8x16xf32>
    %11 = vector.shape_cast %10 : vector<8x16xf32> to vector<8x16x1xf32>
    %c0_6 = arith.constant 0 : index
    %c0_7 = arith.constant 0 : index
    %12 = vector.load %arg10[%c0_6, %c0_7] : memref<8x128xf32, #tpu.memory_space<vmem>>, vector<8x128xf32>
    %13 = vector.broadcast %8 : vector<8x16x1xf32> to vector<8x16x128xf32>
    %14 = arith.addf %4, %13 : vector<8x16x128xf32>
    %cst = arith.constant dense<0xFF800000> : vector<8x128xf32>
    %15 = vector.multi_reduction <maximumf>, %14, %cst [1] : vector<8x16x128xf32> to vector<8x128xf32>
    %16 = arith.maximumf %12, %15 : vector<8x128xf32>
    %c0_8 = arith.constant 0 : index
    %c0_9 = arith.constant 0 : index
    %17 = vector.load %arg10[%c0_8, %c0_9] : memref<8x128xf32, #tpu.memory_space<vmem>>, vector<8x128xf32>
    tpu.vector_store %arg10[%c0_8, %c0_9], %16 {strides = array<i32>} : memref<8x128xf32, #tpu.memory_space<vmem>>, vector<8x128xf32>,
    %c0_10 = arith.constant 0 : index
    %c0_11 = arith.constant 0 : index
    %18 = vector.load %arg11[%c0_10, %c0_11] : memref<8x128xf32, #tpu.memory_space<vmem>>, vector<8x128xf32>
    %19 = vector.broadcast %11 : vector<8x16x1xf32> to vector<8x16x128xf32>
    %20 = arith.addf %4, %19 : vector<8x16x128xf32>
    %cst_12 = arith.constant dense<0xFF800000> : vector<8x128xf32>
    %21 = vector.multi_reduction <maximumf>, %20, %cst_12 [1] : vector<8x16x128xf32> to vector<8x128xf32>
    %22 = arith.maximumf %18, %21 : vector<8x128xf32>
    %c0_13 = arith.constant 0 : index
    %c0_14 = arith.constant 0 : index
    %23 = vector.load %arg11[%c0_13, %c0_14] : memref<8x128xf32, #tpu.memory_space<vmem>>, vector<8x128xf32>
    tpu.vector_store %arg11[%c0_13, %c0_14], %22 {strides = array<i32>} : memref<8x128xf32, #tpu.memory_space<vmem>>, vector<8x128xf32>,
    %c0_i32_15 = arith.constant 0 : i32
    %24 = arith.cmpi eq, %arg1, %c0_i32_15 : i32
    %25 = arith.extui %24 : i1 to i32
    %c0_i32_16 = arith.constant 0 : i32
    %26 = arith.cmpi ne, %25, %c0_i32_16 : i32
    scf.if %26 {
      %c0_17 = arith.constant 0 : index
      %c0_18 = arith.constant 0 : index
      %27 = vector.load %arg10[%c0_17, %c0_18] : memref<8x128xf32, #tpu.memory_space<vmem>>, vector<8x128xf32>
      %c0_19 = arith.constant 0 : index
      %c0_20 = arith.constant 0 : index
      %28 = vector.load %arg4[%c0_19, %c0_20] : memref<128x128xf32, #tpu.memory_space<vmem>>, vector<128x128xf32>
      %cst_21 = arith.constant dense<0.000000e+00> : vector<8x128xf32>
      %29 = tpu.matmul %27, %28, %cst_21 {dimension_numbers = #tpu.dot_dimension_numbers<[1], [0], [0], [1], [0, 0, 1, 1], [], []>} : vector<8x128xf32>, vector<128x128xf32>, vector<8x128xf32> -> vector<8x128xf32>
      %c0_22 = arith.constant 0 : index
      %c0_23 = arith.constant 0 : index
      %30 = vector.load %arg11[%c0_22, %c0_23] : memref<8x128xf32, #tpu.memory_space<vmem>>, vector<8x128xf32>
      %c0_24 = arith.constant 0 : index
      %c0_25 = arith.constant 0 : index
      %31 = vector.load %arg5[%c0_24, %c0_25] : memref<128x128xf32, #tpu.memory_space<vmem>>, vector<128x128xf32>
      %cst_26 = arith.constant dense<0.000000e+00> : vector<8x128xf32>
      %32 = tpu.matmul %30, %31, %cst_26 {dimension_numbers = #tpu.dot_dimension_numbers<[1], [0], [0], [1], [0, 0, 1, 1], [], []>} : vector<8x128xf32>, vector<128x128xf32>, vector<8x128xf32> -> vector<8x128xf32>
      %33 = arith.addf %29, %32 : vector<8x128xf32>
      %c0_27 = arith.constant 0 : index
      %c0_28 = arith.constant 0 : index
      %34 = vector.load %arg6[%c0_27, %c0_28] : memref<1x128xf32, #tpu.memory_space<vmem>>, vector<1x128xf32>
      %35 = vector.broadcast %34 : vector<1x128xf32> to vector<8x128xf32>
      %36 = arith.addf %33, %35 : vector<8x128xf32>
      %cst_29 = arith.constant 0.000000e+00 : f32
      %37 = vector.broadcast %cst_29 : f32 to vector<8x128xf32>
      %38 = arith.maximumf %36, %37 : vector<8x128xf32>
      %c0_30 = arith.constant 0 : index
      %c0_31 = arith.constant 0 : index
      %39 = vector.load %arg7[%c0_30, %c0_31] : memref<128x128xf32, #tpu.memory_space<vmem>>, vector<128x128xf32>
      %cst_32 = arith.constant dense<0.000000e+00> : vector<8x128xf32>
      %40 = tpu.matmul %38, %39, %cst_32 {dimension_numbers = #tpu.dot_dimension_numbers<[1], [0], [0], [1], [0, 0, 1, 1], [], []>} : vector<8x128xf32>, vector<128x128xf32>, vector<8x128xf32> -> vector<8x128xf32>
      %c0_33 = arith.constant 0 : index
      %c0_34 = arith.constant 0 : index
      %41 = vector.load %arg8[%c0_33, %c0_34] : memref<1x128xf32, #tpu.memory_space<vmem>>, vector<1x128xf32>
      %42 = vector.broadcast %41 : vector<1x128xf32> to vector<8x128xf32>
      %43 = arith.addf %40, %42 : vector<8x128xf32>
      %cst_35 = arith.constant 0.000000e+00 : f32
      %44 = vector.broadcast %cst_35 : f32 to vector<8x128xf32>
      %45 = arith.maximumf %43, %44 : vector<8x128xf32>
      %c0_36 = arith.constant 0 : index
      %c0_37 = arith.constant 0 : index
      %46 = vector.load %arg9[%c0_36, %c0_37] : memref<8x128xf32, #tpu.memory_space<vmem>>, vector<8x128xf32>
      tpu.vector_store %arg9[%c0_36, %c0_37], %45 {strides = array<i32>} : memref<8x128xf32, #tpu.memory_space<vmem>>, vector<8x128xf32>,
    } else {
    }
    return
  }
  func.func @transform_0(%arg0: i32, %arg1: i32) -> (i32, i32, i32) {
    %c0_i32 = arith.constant 0 : i32
    %c0_i32_0 = arith.constant 0 : i32
    return %arg0, %arg1, %c0_i32 : i32, i32, i32
  }
  func.func @transform_1(%arg0: i32, %arg1: i32) -> (i32, i32, i32) {
    %c0_i32 = arith.constant 0 : i32
    %c0_i32_0 = arith.constant 0 : i32
    return %arg0, %c0_i32, %arg1 : i32, i32, i32
  }
  func.func @transform_2(%arg0: i32, %arg1: i32) -> (i32, i32) {
    %c0_i32 = arith.constant 0 : i32
    %c0_i32_0 = arith.constant 0 : i32
    %c0_i32_1 = arith.constant 0 : i32
    return %c0_i32, %c0_i32_0 : i32, i32
  }
  func.func @transform_3(%arg0: i32, %arg1: i32) -> (i32, i32) {
    %c0_i32 = arith.constant 0 : i32
    %c0_i32_0 = arith.constant 0 : i32
    %c0_i32_1 = arith.constant 0 : i32
    return %c0_i32, %c0_i32_0 : i32, i32
  }
  func.func @transform_4(%arg0: i32, %arg1: i32) -> (i32, i32) {
    %c0_i32 = arith.constant 0 : i32
    %c0_i32_0 = arith.constant 0 : i32
    %c0_i32_1 = arith.constant 0 : i32
    return %c0_i32, %c0_i32_0 : i32, i32
  }
  func.func @transform_5(%arg0: i32, %arg1: i32) -> (i32, i32) {
    %c0_i32 = arith.constant 0 : i32
    %c0_i32_0 = arith.constant 0 : i32
    %c0_i32_1 = arith.constant 0 : i32
    return %c0_i32, %c0_i32_0 : i32, i32
  }
  func.func @transform_6(%arg0: i32, %arg1: i32) -> (i32, i32) {
    %c0_i32 = arith.constant 0 : i32
    %c0_i32_0 = arith.constant 0 : i32
    %c0_i32_1 = arith.constant 0 : i32
    return %c0_i32, %c0_i32_0 : i32, i32
  }
  func.func @transform_7(%arg0: i32, %arg1: i32) -> (i32, i32) {
    %c0_i32 = arith.constant 0 : i32
    %c0_i32_0 = arith.constant 0 : i32
    return %arg0, %c0_i32 : i32, i32
  }
}

</mosaic_0001>

<llo_original>
// kernel: tpu_custom_call.1
$region0: #{tpu_custom_call.1}
  #allocation0 [shape = 'u32[]', space=smem, size = 0x4, offset = 0x4, fixed_abs, tag = 'smem constant byte address 0x4 - core index']
  #allocation1 [shape = 'u32[144,128]{1,0:T(1,128)}', space=vmem, size = 0x12000, scoped, tag = 'internal scratch']
  #allocation2 [shape = 'f32[8,128]{1,0:T(8,128)}', space=vmem, size = 0x1000, scoped, tag = 'scratch operand']
  #allocation3 [shape = 'f32[8,128]{1,0:T(8,128)}', space=vmem, size = 0x1000, scoped, tag = 'scratch operand']
  %s0 = inlined_call_operand.hbm [shape: bf16[16,16,128], index: 0, kind: input, shape index: {}]
  %s1 = inlined_call_operand.hbm [shape: f32[16,2,16], index: 1, kind: input, shape index: {}]
  %s2 = inlined_call_operand.hbm [shape: f32[128,128], index: 2, kind: input, shape index: {}]
  %s3 = inlined_call_operand.hbm [shape: f32[128,128], index: 3, kind: input, shape index: {}]
  %s4 = inlined_call_operand.vmem [shape: f32[1,128], index: 4, kind: input, shape index: {}]
  %s5 = inlined_call_operand.hbm [shape: f32[128,128], index: 5, kind: input, shape index: {}]
  %s6 = inlined_call_operand.vmem [shape: f32[1,128], index: 6, kind: input, shape index: {}]
  %s7 = inlined_call_operand.hbm [shape: f32[16,128], index: 7, kind: output, shape index: {}]
  %s8 = sld [smem:[#allocation0]]
  $region89: #{tpu_custom_call.1} parent=0
    _
  %s10 = ssub.s32 1, %s8
  %s11 = scalar_select 0, %s10, %s8
  $region1: #{tpu_custom_call.1} parent=0
    #allocation4 [shape = 'u8[65536]{0}', space=vmem, size = 0x10000, scoped, tag = 'input window, operand 0']
    #allocation5 [shape = 's32[2]{0}', space=sflag, size = 0x8, scoped, tag = 'scoped memory for tpu_custom_call.1']
    #allocation6 [shape = 's32[2]{0}', space=sflag, size = 0x8, scoped, tag = 'scoped memory for tpu_custom_call.1']
    #allocation7 [shape = 'u8[16384]{0}', space=vmem, size = 0x4000, scoped, tag = 'input window, operand 1']
    #allocation8 [shape = 's32[2]{0}', space=sflag, size = 0x8, scoped, tag = 'scoped memory for tpu_custom_call.1']
    #allocation9 [shape = 'u8[65536]{0}', space=vmem, size = 0x10000, scoped, tag = 'input window, operand 2, single buffered']
    #allocation10 [shape = 'u8[65536]{0}', space=vmem, size = 0x10000, scoped, tag = 'input window, operand 3, single buffered']
    #allocation11 [shape = 's32[1]{0}', space=sflag, size = 0x4, scoped, tag = 'scoped memory for tpu_custom_call.1']
    #allocation12 [shape = 'u8[65536]{0}', space=vmem, size = 0x10000, scoped, tag = 'input window, operand 5, single buffered']
    #allocation13 [shape = 'u8[8192]{0}', space=vmem, size = 0x2000, scoped, tag = 'output window, operand 0']
    %12 = vsyncpa [#allocation5], 0
    %s13 = scalar_lea.sflag [#allocation5], 1
    %14 = vsyncpa %s13, 0
    %15 = vsyncpa [#allocation8], 0
    %s16 = scalar_lea.sflag [#allocation8], 1
    %17 = vsyncpa %s16, 0
    %18 = vsyncpa [#allocation11], 0
    %19 = vsyncpa [#allocation6], 0
    %s20 = scalar_lea.sflag [#allocation6], 1
    %21 = vsyncpa %s20, 0
    loop: start=0, step=1, limit=4
    $region2: #{tpu_custom_call.1} parent=1 // loop_pre_header
      _
    $region3: #{tpu_custom_call.1} parent=1 // loop_header
      %s23 = sphi 0, %s27
      %p24 = scmp.ge.s32.totalorder %s23, 4
      %s30 = sphi 0, %s42
      %s31 = sphi 0, %s38
      %s32 = sphi 0, %s30
      %s33 = sphi 0, %s31
      %s34 = sphi 0, %s32
      %s35 = sphi 0, %s33
      %s47 = sphi 0, %s49
      %s50 = sphi 0, %s47
      %s51 = sphi 0, %s50
      %s67 = sphi 0, %s51
      %s75 = sphi 0, %s77
      %s78 = sphi 0, %s75
      %s79 = sphi 0, %s78
      %s95 = sphi 0, %s79
      %s99 = sphi 0, %s99
      %s101 = sphi 0, %s99
      %s102 = sphi 0, %s101
      %s116 = sphi 0, %s102
      %s120 = sphi 0, %s120
      %s122 = sphi 0, %s120
      %s123 = sphi 0, %s122
      %s137 = sphi 0, %s123
      %s141 = sphi 0, %s141
      %s143 = sphi 0, %s141
      %s144 = sphi 0, %s143
      %s158 = sphi 0, %s144
      %s162 = sphi 0, %s162
      %s164 = sphi 0, %s162
      %s165 = sphi 0, %s164
      %s179 = sphi 0, %s165
      %s183 = sphi 0, %s183
      %s185 = sphi 0, %s183
      %s186 = sphi 0, %s185
      %s200 = sphi 0, %s186
      %s206 = sphi 0, %s208
      %s209 = sphi 0, %s206
      %s210 = sphi 0, %s209
      %s226 = sphi 0, %s210
    $region4: #{tpu_custom_call.1} parent=1 // loop_header_branch
      %26 = sbr.rel (%p24) target = $region8
    $region5: #{tpu_custom_call.1} parent=1 // loop_body
      %s28 = ssub.s32 %s23, 1
      %s29 = ssub.s32 %s23, 2
      %s36 = sadd.s32 1, %s31
      %p37 = scmp.ge.s32.totalorder %s36, 1
      %s38 = scalar_select %p37, 0, %s36
      %s39 = sadd.s32 1, %s30
      %s40 = scalar_select %p37, %s39, %s30
      %p41 = scmp.ge.s32.totalorder %s40, 2
      %s42 = scalar_select %p41, 0, %s40
      %s43 = ssub.s32 %s30, %s42
      %s44 = ssub.s32 %s31, %s38
      %s45 = sor.u32 %s43, %s44
      %p46 = scmp.eq.s32.totalorder %s45, 0
      %s48 = sadd.s32 %s47, 1
      %s49 = scalar_select %p46, %s47, %s48
      %p52 = pneg %p46
      %p53 = scmp.eq.s32.totalorder %s23, 1
      %p54 = por %p52, %p53
      %p55 = scmp.ne.s32.totalorder %s47, %s50
      %p56 = scmp.eq.s32.totalorder %s23, 0
      %p57 = por %p55, %p56
      %p58 = scmp.ne.s32.totalorder %s47, %s50
      %p59 = scmp.eq.s32.totalorder %s28, 1
      %p60 = por %p58, %p59
      %p61 = scmp.ne.s32.totalorder %s50, %s51
      %p62 = scmp.eq.s32.totalorder %s28, 0
      %p63 = por %p61, %p62
      %p64 = scmp.ne.s32.totalorder %s50, %s51
      %p65 = scmp.eq.s32.totalorder %s29, 1
      %p66 = por %p64, %p65
      %p68 = scmp.ne.s32.totalorder %s51, %s67
      %p69 = scmp.eq.s32.totalorder %s29, 0
      %p70 = por %p68, %p69
      %s71 = ssub.s32 %s30, %s42
      %s72 = ssub.s32 %s31, %s38
      %s73 = sor.u32 %s71, %s72
      %p74 = scmp.eq.s32.totalorder %s73, 0
      %s76 = sadd.s32 %s75, 1
      %s77 = scalar_select %p74, %s75, %s76
      %p80 = pneg %p74
      %p81 = scmp.eq.s32.totalorder %s23, 1
      %p82 = por %p80, %p81
      %p83 = scmp.ne.s32.totalorder %s75, %s78
      %p84 = scmp.eq.s32.totalorder %s23, 0
      %p85 = por %p83, %p84
      %p86 = scmp.ne.s32.totalorder %s75, %s78
      %p87 = scmp.eq.s32.totalorder %s28, 1
      %p88 = por %p86, %p87
      %p89 = scmp.ne.s32.totalorder %s78, %s79
      %p90 = scmp.eq.s32.totalorder %s28, 0
      %p91 = por %p89, %p90
      %p92 = scmp.ne.s32.totalorder %s78, %s79
      %p93 = scmp.eq.s32.totalorder %s29, 1
      %p94 = por %p92, %p93
      %p96 = scmp.ne.s32.totalorder %s79, %s95
      %p97 = scmp.eq.s32.totalorder %s29, 0
      %p98 = por %p96, %p97
      %s100 = sadd.s32 %s99, 1
      %p103 = scmp.eq.s32.totalorder %s23, 1
      %p104 = scmp.ne.s32.totalorder %s99, %s101
      %p105 = scmp.eq.s32.totalorder %s23, 0
      %p106 = por %p104, %p105
      %p107 = scmp.ne.s32.totalorder %s99, %s101
      %p108 = scmp.eq.s32.totalorder %s28, 1
      %p109 = por %p107, %p108
      %p110 = scmp.ne.s32.totalorder %s101, %s102
      %p111 = scmp.eq.s32.totalorder %s28, 0
      %p112 = por %p110, %p111
      %p113 = scmp.ne.s32.totalorder %s101, %s102
      %p114 = scmp.eq.s32.totalorder %s29, 1
      %p115 = por %p113, %p114
      %p117 = scmp.ne.s32.totalorder %s102, %s116
      %p118 = scmp.eq.s32.totalorder %s29, 0
      %p119 = por %p117, %p118
      %s121 = sadd.s32 %s120, 1
      %p124 = scmp.eq.s32.totalorder %s23, 1
      %p125 = scmp.ne.s32.totalorder %s120, %s122
      %p126 = scmp.eq.s32.totalorder %s23, 0
      %p127 = por %p125, %p126
      %p128 = scmp.ne.s32.totalorder %s120, %s122
      %p129 = scmp.eq.s32.totalorder %s28, 1
      %p130 = por %p128, %p129
      %p131 = scmp.ne.s32.totalorder %s122, %s123
      %p132 = scmp.eq.s32.totalorder %s28, 0
      %p133 = por %p131, %p132
      %p134 = scmp.ne.s32.totalorder %s122, %s123
      %p135 = scmp.eq.s32.totalorder %s29, 1
      %p136 = por %p134, %p135
      %p138 = scmp.ne.s32.totalorder %s123, %s137
      %p139 = scmp.eq.s32.totalorder %s29, 0
      %p140 = por %p138, %p139
      %s142 = sadd.s32 %s141, 1
      %p145 = scmp.eq.s32.totalorder %s23, 1
      %p146 = scmp.ne.s32.totalorder %s141, %s143
      %p147 = scmp.eq.s32.totalorder %s23, 0
      %p148 = por %p146, %p147
      %p149 = scmp.ne.s32.totalorder %s141, %s143
      %p150 = scmp.eq.s32.totalorder %s28, 1
      %p151 = por %p149, %p150
      %p152 = scmp.ne.s32.totalorder %s143, %s144
      %p153 = scmp.eq.s32.totalorder %s28, 0
      %p154 = por %p152, %p153
      %p155 = scmp.ne.s32.totalorder %s143, %s144
      %p156 = scmp.eq.s32.totalorder %s29, 1
      %p157 = por %p155, %p156
      %p159 = scmp.ne.s32.totalorder %s144, %s158
      %p160 = scmp.eq.s32.totalorder %s29, 0
      %p161 = por %p159, %p160
      %s163 = sadd.s32 %s162, 1
      %p166 = scmp.eq.s32.totalorder %s23, 1
      %p167 = scmp.ne.s32.totalorder %s162, %s164
      %p168 = scmp.eq.s32.totalorder %s23, 0
      %p169 = por %p167, %p168
      %p170 = scmp.ne.s32.totalorder %s162, %s164
      %p171 = scmp.eq.s32.totalorder %s28, 1
      %p172 = por %p170, %p171
      %p173 = scmp.ne.s32.totalorder %s164, %s165
      %p174 = scmp.eq.s32.totalorder %s28, 0
      %p175 = por %p173, %p174
      %p176 = scmp.ne.s32.totalorder %s164, %s165
      %p177 = scmp.eq.s32.totalorder %s29, 1
      %p178 = por %p176, %p177
      %p180 = scmp.ne.s32.totalorder %s165, %s179
      %p181 = scmp.eq.s32.totalorder %s29, 0
      %p182 = por %p180, %p181
      %s184 = sadd.s32 %s183, 1
      %p187 = scmp.eq.s32.totalorder %s23, 1
      %p188 = scmp.ne.s32.totalorder %s183, %s185
      %p189 = scmp.eq.s32.totalorder %s23, 0
      %p190 = por %p188, %p189
      %p191 = scmp.ne.s32.totalorder %s183, %s185
      %p192 = scmp.eq.s32.totalorder %s28, 1
      %p193 = por %p191, %p192
      %p194 = scmp.ne.s32.totalorder %s185, %s186
      %p195 = scmp.eq.s32.totalorder %s28, 0
      %p196 = por %p194, %p195
      %p197 = scmp.ne.s32.totalorder %s185, %s186
      %p198 = scmp.eq.s32.totalorder %s29, 1
      %p199 = por %p197, %p198
      %p201 = scmp.ne.s32.totalorder %s186, %s200
      %p202 = scmp.eq.s32.totalorder %s29, 0
      %p203 = por %p201, %p202
      %s204 = ssub.s32 %s30, %s42
      %p205 = scmp.eq.s32.totalorder %s204, 0
      %s207 = sadd.s32 %s206, 1
      %s208 = scalar_select %p205, %s206, %s207
      %p211 = pneg %p205
      %p212 = scmp.eq.s32.totalorder %s23, 1
      %p213 = por %p211, %p212
      %p214 = scmp.ne.s32.totalorder %s206, %s209
      %p215 = scmp.eq.s32.totalorder %s23, 0
      %p216 = por %p214, %p215
      %p217 = scmp.ne.s32.totalorder %s206, %s209
      %p218 = scmp.eq.s32.totalorder %s28, 1
      %p219 = por %p217, %p218
      %p220 = scmp.ne.s32.totalorder %s209, %s210
      %p221 = scmp.eq.s32.totalorder %s28, 0
      %p222 = por %p220, %p221
      %p223 = scmp.ne.s32.totalorder %s209, %s210
      %p224 = scmp.eq.s32.totalorder %s29, 1
      %p225 = por %p223, %p224
      %p227 = scmp.ne.s32.totalorder %s210, %s226
      %p228 = scmp.eq.s32.totalorder %s29, 0
      %p229 = por %p227, %p228
      %p230 = scmp.le.s32.totalorder 1, %s23
      %p231 = scmp.lt.s32.totalorder %s23, 3
      %p232 = pnand %p230, %p231
      %p233 = pneg %p232
      // Predicated region
      $region9: #{tpu_custom_call.1} parent=5 // pred_check
        _
      $region10: #{tpu_custom_call.1} parent=5 // pred_check_branch
        %235 = sbr.rel (%p232) target = $region12
      $region11: #{tpu_custom_call.1} parent=5 // pred_region
        %s236 = ssub.s32 %s23, 1
        // Predicated region
        $region13: #{tpu_custom_call.1} parent=11 // pred_check
          %p237 = pneg %p112
        $region14: #{tpu_custom_call.1} parent=11 // pred_check_branch
          %239 = sbr.rel (%p237) target = $region16
        $region15: #{tpu_custom_call.1} parent=11 // pred_region
          %s241 = ssub.s32 2048, 2048
          %242 = vsyncadd [#allocation8], %s241
          %s243 = sshll.u32 [#allocation9], 4
          %s244 = int_to_ptr.vmem [resolvable:$true] %s243
          %249 = dma.hbm_to_vmem [thread:$0]  %s2, 2048, %s244, [#allocation8], 128, 128, 8
        $region16: #{tpu_custom_call.1} parent=11 // pred_fallthru
          _
        // Predicated region
        $region17: #{tpu_custom_call.1} parent=11 // pred_check
          %p250 = pneg %p133
        $region18: #{tpu_custom_call.1} parent=11 // pred_check_branch
          %252 = sbr.rel (%p250) target = $region20
        $region19: #{tpu_custom_call.1} parent=11 // pred_region
          %s254 = ssub.s32 2048, 2048
          %255 = vsyncadd [#allocation11], %s254
          %s256 = sshll.u32 [#allocation10], 4
          %s257 = int_to_ptr.vmem [resolvable:$true] %s256
          %262 = dma.hbm_to_vmem [thread:$0]  %s3, 2048, %s257, [#allocation11], 128, 128, 8
        $region20: #{tpu_custom_call.1} parent=11 // pred_fallthru
          _
        // Predicated region
        $region21: #{tpu_custom_call.1} parent=11 // pred_check
          %p263 = pneg %p154
        $region22: #{tpu_custom_call.1} parent=11 // pred_check_branch
          %265 = sbr.rel (%p263) target = $region24
        $region23: #{tpu_custom_call.1} parent=11 // pred_region
          _
        $region24: #{tpu_custom_call.1} parent=11 // pred_fallthru
          _
        // Predicated region
        $region25: #{tpu_custom_call.1} parent=11 // pred_check
          %p266 = pneg %p175
        $region26: #{tpu_custom_call.1} parent=11 // pred_check_branch
          %268 = sbr.rel (%p266) target = $region28
        $region27: #{tpu_custom_call.1} parent=11 // pred_region
          %s270 = ssub.s32 2048, 2048
          %271 = vsyncadd [#allocation11], %s270
          %s272 = sshll.u32 [#allocation12], 4
          %s273 = int_to_ptr.vmem [resolvable:$true] %s272
          %278 = dma.hbm_to_vmem [thread:$0]  %s5, 2048, %s273, [#allocation11], 128, 128, 8
        $region28: #{tpu_custom_call.1} parent=11 // pred_fallthru
          _
        // Predicated region
        $region29: #{tpu_custom_call.1} parent=11 // pred_check
          %p279 = pneg %p196
        $region30: #{tpu_custom_call.1} parent=11 // pred_check_branch
          %281 = sbr.rel (%p279) target = $region32
        $region31: #{tpu_custom_call.1} parent=11 // pred_region
          _
        $region32: #{tpu_custom_call.1} parent=11 // pred_fallthru
          _
      $region12: #{tpu_custom_call.1} parent=5 // pred_fallthru
        _
      %p282 = scmp.lt.s32.totalorder %s23, 2
      // Predicated region
      $region33: #{tpu_custom_call.1} parent=5 // pred_check
        %p283 = pneg %p282
      $region34: #{tpu_custom_call.1} parent=5 // pred_check_branch
        %285 = sbr.rel (%p283) target = $region36
      $region35: #{tpu_custom_call.1} parent=5 // pred_region
        // Predicated region
        $region37: #{tpu_custom_call.1} parent=35 // pred_check
          %p286 = pneg %p57
        $region38: #{tpu_custom_call.1} parent=35 // pred_check_branch
          %288 = sbr.rel (%p286) target = $region40
        $region39: #{tpu_custom_call.1} parent=35 // pred_region
          %s289 = sand.u32 %s47, 1
          %s290 = scalar_lea.sflag [#allocation5], %s289
          %s291 = sand.u32 %s47, 1
          %s292 = smul.addr %s291, 64
          %s293 = scalar_lea.vmem [#allocation4], %s292
          %s294 = smul.u32 8, %s30
          %s295 = smul.u32 2, %s31
          %s297 = ssub.s32 1024, 1024
          %298 = vsyncadd %s290, %s297
          %s299 = smul.addr %s294, 2
          %s300 = sadd.s32 %s295, %s299
          %s301 = smul.addr %s300, 64
          %s302 = scalar_lea.hbm %s0, %s301
          %s303 = sshll.u32 %s293, 4
          %s304 = int_to_ptr.vmem [resolvable:$true] %s303
          %309 = dma.hbm_to_vmem [thread:$0]  %s302, 1024, %s304, %s290, 64, 64, 4
        $region40: #{tpu_custom_call.1} parent=35 // pred_fallthru
          _
        // Predicated region
        $region41: #{tpu_custom_call.1} parent=35 // pred_check
          %p310 = pneg %p85
        $region42: #{tpu_custom_call.1} parent=35 // pred_check_branch
          %312 = sbr.rel (%p310) target = $region44
        $region43: #{tpu_custom_call.1} parent=35 // pred_region
          %s313 = sand.u32 %s23, 1
          %s314 = scalar_lea.sflag [#allocation8], %s313
          %s315 = sand.u32 %s75, 1
          %s316 = smul.addr %s315, 16
          %s317 = scalar_lea.vmem [#allocation7], %s316
          %s318 = smul.u32 8, %s30
          %s320 = ssub.s32 256, 256
          %321 = vsyncadd %s314, %s320
          %s322 = sadd.s32 %s31, %s318
          %s323 = smul.addr %s322, 32
          %s324 = scalar_lea.hbm %s1, %s323
          %s325 = sshll.u32 %s317, 4
          %s326 = int_to_ptr.vmem [resolvable:$true] %s325
          %331 = dma.hbm_to_vmem [thread:$0]  %s324, 256, %s326, %s314, 32, 32, 2
        $region44: #{tpu_custom_call.1} parent=35 // pred_fallthru
          _
      $region36: #{tpu_custom_call.1} parent=5 // pred_fallthru
        _
      %p332 = scmp.le.s32.totalorder 1, %s23
      %p333 = scmp.lt.s32.totalorder %s23, 3
      %p334 = pnand %p332, %p333
      %p335 = pneg %p334
      // Predicated region
      $region45: #{tpu_custom_call.1} parent=5 // pred_check
        _
      $region46: #{tpu_custom_call.1} parent=5 // pred_check_branch
        %337 = sbr.rel (%p334) target = $region48
      $region47: #{tpu_custom_call.1} parent=5 // pred_region
        %s338 = ssub.s32 %s23, 1
        %s339 = sand.u32 %s50, 1
        %s340 = scalar_lea.sflag [#allocation5], %s339
        %s341 = sand.u32 %s50, 1
        %s342 = smul.addr %s341, 64
        %s343 = scalar_lea.vmem [#allocation4], %s342
        // Predicated region
        $region49: #{tpu_custom_call.1} parent=47 // pred_check
          %p344 = pneg %p63
        $region50: #{tpu_custom_call.1} parent=47 // pred_check_branch
          %346 = sbr.rel (%p344) target = $region52
        $region51: #{tpu_custom_call.1} parent=47 // pred_region
          %347 = dma.done %s340, 1024
        $region52: #{tpu_custom_call.1} parent=47 // pred_fallthru
          _
        %s348 = sand.u32 %s28, 1
        %s349 = scalar_lea.sflag [#allocation8], %s348
        %s350 = sand.u32 %s78, 1
        %s351 = smul.addr %s350, 16
        %s352 = scalar_lea.vmem [#allocation7], %s351
        // Predicated region
        $region53: #{tpu_custom_call.1} parent=47 // pred_check
          %p353 = pneg %p91
        $region54: #{tpu_custom_call.1} parent=47 // pred_check_branch
          %355 = sbr.rel (%p353) target = $region56
        $region55: #{tpu_custom_call.1} parent=47 // pred_region
          %356 = dma.done %s349, 256
        $region56: #{tpu_custom_call.1} parent=47 // pred_fallthru
          _
        // Predicated region
        $region57: #{tpu_custom_call.1} parent=47 // pred_check
          %p357 = pneg %p112
        $region58: #{tpu_custom_call.1} parent=47 // pred_check_branch
          %359 = sbr.rel (%p357) target = $region60
        $region59: #{tpu_custom_call.1} parent=47 // pred_region
          %360 = dma.done [#allocation8], 2048
        $region60: #{tpu_custom_call.1} parent=47 // pred_fallthru
          _
        // Predicated region
        $region61: #{tpu_custom_call.1} parent=47 // pred_check
          %p361 = pneg %p133
        $region62: #{tpu_custom_call.1} parent=47 // pred_check_branch
          %363 = sbr.rel (%p361) target = $region64
        $region63: #{tpu_custom_call.1} parent=47 // pred_region
          %364 = dma.done [#allocation11], 2048
        $region64: #{tpu_custom_call.1} parent=47 // pred_fallthru
          _
        // Predicated region
        $region65: #{tpu_custom_call.1} parent=47 // pred_check
          %p365 = pneg %p175
        $region66: #{tpu_custom_call.1} parent=47 // pred_check_branch
          %367 = sbr.rel (%p365) target = $region68
        $region67: #{tpu_custom_call.1} parent=47 // pred_region
          %368 = dma.done [#allocation11], 2048
        $region68: #{tpu_custom_call.1} parent=47 // pred_fallthru
          _
        %s369 = sand.u32 %s50, 1
        %s370 = scalar_lea.sflag [#allocation5], %s369
        %s371 = sand.u32 %s50, 1
        %s372 = smul.addr %s371, 64
        %s373 = scalar_lea.vmem [#allocation4], %s372
        %p374 = pneg %p63
        %p375 = pneg %p60
        %s376 = sand.u32 %s28, 1
        %s377 = scalar_lea.sflag [#allocation8], %s376
        %s378 = sand.u32 %s78, 1
        %s379 = smul.addr %s378, 16
        %s380 = scalar_lea.vmem [#allocation7], %s379
        %p381 = pneg %p91
        %p382 = pneg %p88
        %p383 = pneg %p112
        %p384 = pneg %p109
        %p385 = pneg %p133
        %p386 = pneg %p130
        %p387 = pneg %p154
        %p388 = pneg %p151
        %p389 = pneg %p175
        %p390 = pneg %p172
        %p391 = pneg %p196
        %p392 = pneg %p193
        %p393 = pneg %p222
        %p394 = pneg %p219
        %s395 = sand.u32 %s209, 1
        %s396 = scalar_lea.sflag [#allocation6], %s395
        %s397 = sand.u32 %s209, 1
        %s398 = smul.addr %s397, 8
        %s399 = scalar_lea.vmem [#allocation13], %s398
        %s400 = smul.u32 8, %s32
        %s401 = smul.u32 2, %s33
        %s402 = smul.u32 8, %s32
        %p403 = scmp.eq.s32.totalorder %s33, 0
        // Predicated region
        $region69: #{tpu_custom_call.1} parent=47 // pred_check
          %p404 = pneg %p403
        $region70: #{tpu_custom_call.1} parent=47 // pred_check_branch
          %406 = sbr.rel (%p404) target = $region72
        $region71: #{tpu_custom_call.1} parent=47 // pred_region
          %407 = vst [vmem:[#allocation2] sm:$0xff] -inf
          %408 = vst [vmem:[#allocation3] sm:$0xff] -inf
        $region72: #{tpu_custom_call.1} parent=47 // pred_fallthru
          _
        %v409 = vld [vmem:[%s343] sm:$0xf]
        %v410 = vld [vmem:[%s343 + $0x4] sm:$0xf]
        %v411 = vld [vmem:[%s343 + $0x8] sm:$0xf]
        %v412 = vld [vmem:[%s343 + $0xc] sm:$0xf]
        %v413 = vld [vmem:[%s343 + $0x10] sm:$0xf]
        %v414 = vld [vmem:[%s343 + $0x14] sm:$0xf]
        %v415 = vld [vmem:[%s343 + $0x18] sm:$0xf]
        %v416 = vld [vmem:[%s343 + $0x1c] sm:$0xf]
        %v417 = vld [vmem:[%s343 + $0x20] sm:$0xf]
        %v418 = vld [vmem:[%s343 + $0x24] sm:$0xf]
        %v419 = vld [vmem:[%s343 + $0x28] sm:$0xf]
        %v420 = vld [vmem:[%s343 + $0x2c] sm:$0xf]
        %v421 = vld [vmem:[%s343 + $0x30] sm:$0xf]
        %v422 = vld [vmem:[%s343 + $0x34] sm:$0xf]
        %v423 = vld [vmem:[%s343 + $0x38] sm:$0xf]
        %v424 = vld [vmem:[%s343 + $0x3c] sm:$0xf]
        %v425 = vunpack.c.l.bf16 %v409
        %v426 = vunpack.c.l.bf16 %v410
        %v427 = vunpack.c.l.bf16 %v411
        %v428 = vunpack.c.l.bf16 %v412
        %v429 = vunpack.c.l.bf16 %v413
        %v430 = vunpack.c.l.bf16 %v414
        %v431 = vunpack.c.l.bf16 %v415
        %v432 = vunpack.c.l.bf16 %v416
        %v433 = vunpack.c.l.bf16 %v417
        %v434 = vunpack.c.l.bf16 %v418
        %v435 = vunpack.c.l.bf16 %v419
        %v436 = vunpack.c.l.bf16 %v420
        %v437 = vunpack.c.l.bf16 %v421
        %v438 = vunpack.c.l.bf16 %v422
        %v439 = vunpack.c.l.bf16 %v423
        %v440 = vunpack.c.l.bf16 %v424
        %v441 = vld [vmem:[%s352] sm:$0x3]
        %v442 = vld [vmem:[%s352 + $0x2] sm:$0x3]
        %v443 = vld [vmem:[%s352 + $0x4] sm:$0x3]
        %v444 = vld [vmem:[%s352 + $0x6] sm:$0x3]
        %v445 = vld [vmem:[%s352 + $0x8] sm:$0x3]
        %v446 = vld [vmem:[%s352 + $0xa] sm:$0x3]
        %v447 = vld [vmem:[%s352 + $0xc] sm:$0x3]
        %v448 = vld [vmem:[%s352 + $0xe] sm:$0x3]
        %v449 = vlaneseq
        %v450 = vshrl.u32 %v449, 7
        %v451 = vsub.s32 0, %v450
        %v452 = vrot.slane %v441, %v451
        %454 = vbcast.lane.b32.xlu0 %v452, 256
        %v455 = vpop.permute.xlu0 %454
        %s457 = sor.u32 256, 8
        %458 = vbcast.lane.b32.xlu0 %v452, %s457
        %v459 = vpop.permute.xlu0 %458
        %v460 = vlaneseq
        %v461 = vshrl.u32 %v460, 7
        %v462 = vsub.s32 0, %v461
        %v463 = vrot.slane %v442, %v462
        %465 = vbcast.lane.b32.xlu0 %v463, 256
        %v466 = vpop.permute.xlu0 %465
        %s468 = sor.u32 256, 8
        %469 = vbcast.lane.b32.xlu0 %v463, %s468
        %v470 = vpop.permute.xlu0 %469
        %v471 = vlaneseq
        %v472 = vshrl.u32 %v471, 7
        %v473 = vsub.s32 0, %v472
        %v474 = vrot.slane %v443, %v473
        %476 = vbcast.lane.b32.xlu0 %v474, 256
        %v477 = vpop.permute.xlu0 %476
        %s479 = sor.u32 256, 8
        %480 = vbcast.lane.b32.xlu0 %v474, %s479
        %v481 = vpop.permute.xlu0 %480
        %v482 = vlaneseq
        %v483 = vshrl.u32 %v482, 7
        %v484 = vsub.s32 0, %v483
        %v485 = vrot.slane %v444, %v484
        %487 = vbcast.lane.b32.xlu0 %v485, 256
        %v488 = vpop.permute.xlu0 %487
        %s490 = sor.u32 256, 8
        %491 = vbcast.lane.b32.xlu0 %v485, %s490
        %v492 = vpop.permute.xlu0 %491
        %v493 = vlaneseq
        %v494 = vshrl.u32 %v493, 7
        %v495 = vsub.s32 0, %v494
        %v496 = vrot.slane %v445, %v495
        %498 = vbcast.lane.b32.xlu0 %v496, 256
        %v499 = vpop.permute.xlu0 %498
        %s501 = sor.u32 256, 8
        %502 = vbcast.lane.b32.xlu0 %v496, %s501
        %v503 = vpop.permute.xlu0 %502
        %v504 = vlaneseq
        %v505 = vshrl.u32 %v504, 7
        %v506 = vsub.s32 0, %v505
        %v507 = vrot.slane %v446, %v506
        %509 = vbcast.lane.b32.xlu0 %v507, 256
        %v510 = vpop.permute.xlu0 %509
        %s512 = sor.u32 256, 8
        %513 = vbcast.lane.b32.xlu0 %v507, %s512
        %v514 = vpop.permute.xlu0 %513
        %v515 = vlaneseq
        %v516 = vshrl.u32 %v515, 7
        %v517 = vsub.s32 0, %v516
        %v518 = vrot.slane %v447, %v517
        %520 = vbcast.lane.b32.xlu0 %v518, 256
        %v521 = vpop.permute.xlu0 %520
        %s523 = sor.u32 256, 8
        %524 = vbcast.lane.b32.xlu0 %v518, %s523
        %v525 = vpop.permute.xlu0 %524
        %v526 = vlaneseq
        %v527 = vshrl.u32 %v526, 7
        %v528 = vsub.s32 0, %v527
        %v529 = vrot.slane %v448, %v528
        %531 = vbcast.lane.b32.xlu0 %v529, 256
        %v532 = vpop.permute.xlu0 %531
        %s534 = sor.u32 256, 8
        %535 = vbcast.lane.b32.xlu0 %v529, %s534
        %v536 = vpop.permute.xlu0 %535
        %v537 = vlaneseq
        %v538 = vshrl.u32 %v537, 7
        %v539 = vsub.s32 1, %v538
        %v540 = vrot.slane %v441, %v539
        %542 = vbcast.lane.b32.xlu0 %v540, 256
        %v543 = vpop.permute.xlu0 %542
        %s545 = sor.u32 256, 8
        %546 = vbcast.lane.b32.xlu0 %v540, %s545
        %v547 = vpop.permute.xlu0 %546
        %v548 = vlaneseq
        %v549 = vshrl.u32 %v548, 7
        %v550 = vsub.s32 1, %v549
        %v551 = vrot.slane %v442, %v550
        %553 = vbcast.lane.b32.xlu0 %v551, 256
        %v554 = vpop.permute.xlu0 %553
        %s556 = sor.u32 256, 8
        %557 = vbcast.lane.b32.xlu0 %v551, %s556
        %v558 = vpop.permute.xlu0 %557
        %v559 = vlaneseq
        %v560 = vshrl.u32 %v559, 7
        %v561 = vsub.s32 1, %v560
        %v562 = vrot.slane %v443, %v561
        %564 = vbcast.lane.b32.xlu0 %v562, 256
        %v565 = vpop.permute.xlu0 %564
        %s567 = sor.u32 256, 8
        %568 = vbcast.lane.b32.xlu0 %v562, %s567
        %v569 = vpop.permute.xlu0 %568
        %v570 = vlaneseq
        %v571 = vshrl.u32 %v570, 7
        %v572 = vsub.s32 1, %v571
        %v573 = vrot.slane %v444, %v572
        %575 = vbcast.lane.b32.xlu0 %v573, 256
        %v576 = vpop.permute.xlu0 %575
        %s578 = sor.u32 256, 8
        %579 = vbcast.lane.b32.xlu0 %v573, %s578
        %v580 = vpop.permute.xlu0 %579
        %v581 = vlaneseq
        %v582 = vshrl.u32 %v581, 7
        %v583 = vsub.s32 1, %v582
        %v584 = vrot.slane %v445, %v583
        %586 = vbcast.lane.b32.xlu0 %v584, 256
        %v587 = vpop.permute.xlu0 %586
        %s589 = sor.u32 256, 8
        %590 = vbcast.lane.b32.xlu0 %v584, %s589
        %v591 = vpop.permute.xlu0 %590
        %v592 = vlaneseq
        %v593 = vshrl.u32 %v592, 7
        %v594 = vsub.s32 1, %v593
        %v595 = vrot.slane %v446, %v594
        %597 = vbcast.lane.b32.xlu0 %v595, 256
        %v598 = vpop.permute.xlu0 %597
        %s600 = sor.u32 256, 8
        %601 = vbcast.lane.b32.xlu0 %v595, %s600
        %v602 = vpop.permute.xlu0 %601
        %v603 = vlaneseq
        %v604 = vshrl.u32 %v603, 7
        %v605 = vsub.s32 1, %v604
        %v606 = vrot.slane %v447, %v605
        %608 = vbcast.lane.b32.xlu0 %v606, 256
        %v609 = vpop.permute.xlu0 %608
        %s611 = sor.u32 256, 8
        %612 = vbcast.lane.b32.xlu0 %v606, %s611
        %v613 = vpop.permute.xlu0 %612
        %v614 = vlaneseq
        %v615 = vshrl.u32 %v614, 7
        %v616 = vsub.s32 1, %v615
        %v617 = vrot.slane %v448, %v616
        %619 = vbcast.lane.b32.xlu0 %v617, 256
        %v620 = vpop.permute.xlu0 %619
        %s622 = sor.u32 256, 8
        %623 = vbcast.lane.b32.xlu0 %v617, %s622
        %v624 = vpop.permute.xlu0 %623
        %v625 = vld [vmem:[#allocation2] sm:$0xff]
        %v626 = vadd.f32 %v425, %v455
        %v627 = vadd.f32 %v426, %v459
        %v628 = vadd.f32 %v427, %v466
        %v629 = vadd.f32 %v428, %v470
        %v630 = vadd.f32 %v429, %v477
        %v631 = vadd.f32 %v430, %v481
        %v632 = vadd.f32 %v431, %v488
        %v633 = vadd.f32 %v432, %v492
        %v634 = vadd.f32 %v433, %v499
        %v635 = vadd.f32 %v434, %v503
        %v636 = vadd.f32 %v435, %v510
        %v637 = vadd.f32 %v436, %v514
        %v638 = vadd.f32 %v437, %v521
        %v639 = vadd.f32 %v438, %v525
        %v640 = vadd.f32 %v439, %v532
        %v641 = vadd.f32 %v440, %v536
        %v642 = vmax.f32 %v626, %v627
        %v643 = vrot.slane %v642, 4
        %v644 = vmax.f32 %v642, %v643
        %v645 = vrot.slane %v644, 2
        %v646 = vmax.f32 %v644, %v645
        %v647 = vrot.slane %v646, 1
        %v648 = vmax.f32 %v646, %v647
        %v649 = vmax.f32 %v628, %v629
        %v650 = vrot.slane %v649, 4
        %v651 = vmax.f32 %v649, %v650
        %v652 = vrot.slane %v651, 2
        %v653 = vmax.f32 %v651, %v652
        %v654 = vrot.slane %v653, 1
        %v655 = vmax.f32 %v653, %v654
        %v656 = vmax.f32 %v630, %v631
        %v657 = vrot.slane %v656, 4
        %v658 = vmax.f32 %v656, %v657
        %v659 = vrot.slane %v658, 2
        %v660 = vmax.f32 %v658, %v659
        %v661 = vrot.slane %v660, 1
        %v662 = vmax.f32 %v660, %v661
        %v663 = vmax.f32 %v632, %v633
        %v664 = vrot.slane %v663, 4
        %v665 = vmax.f32 %v663, %v664
        %v666 = vrot.slane %v665, 2
        %v667 = vmax.f32 %v665, %v666
        %v668 = vrot.slane %v667, 1
        %v669 = vmax.f32 %v667, %v668
        %v670 = vmax.f32 %v634, %v635
        %v671 = vrot.slane %v670, 4
        %v672 = vmax.f32 %v670, %v671
        %v673 = vrot.slane %v672, 2
        %v674 = vmax.f32 %v672, %v673
        %v675 = vrot.slane %v674, 1
        %v676 = vmax.f32 %v674, %v675
        %v677 = vmax.f32 %v636, %v637
        %v678 = vrot.slane %v677, 4
        %v679 = vmax.f32 %v677, %v678
        %v680 = vrot.slane %v679, 2
        %v681 = vmax.f32 %v679, %v680
        %v682 = vrot.slane %v681, 1
        %v683 = vmax.f32 %v681, %v682
        %v684 = vmax.f32 %v638, %v639
        %v685 = vrot.slane %v684, 4
        %v686 = vmax.f32 %v684, %v685
        %v687 = vrot.slane %v686, 2
        %v688 = vmax.f32 %v686, %v687
        %v689 = vrot.slane %v688, 1
        %v690 = vmax.f32 %v688, %v689
        %v691 = vmax.f32 %v640, %v641
        %v692 = vrot.slane %v691, 4
        %v693 = vmax.f32 %v691, %v692
        %v694 = vrot.slane %v693, 2
        %v695 = vmax.f32 %v693, %v694
        %v696 = vrot.slane %v695, 1
        %v697 = vmax.f32 %v695, %v696
        %vm706 = vcmask 1041409
        %v707 = vsel %vm706, %v655, %v648
        %vm708 = vcmask 1042434
        %v709 = vsel %vm708, %v662, %v707
        %vm710 = vcmask 1043459
        %v711 = vsel %vm710, %v669, %v709
        %vm712 = vcmask 1044484
        %v713 = vsel %vm712, %v676, %v711
        %vm714 = vcmask 1045509
        %v715 = vsel %vm714, %v683, %v713
        %vm716 = vcmask 1046534
        %v717 = vsel %vm716, %v690, %v715
        %vm718 = vcmask 1047559
        %v719 = vsel %vm718, %v697, %v717
        %v721 = vmax.f32 %v625, %v719
        %722 = vst [vmem:[#allocation2] sm:$0xff] %v721
        %v723 = vld [vmem:[#allocation3] sm:$0xff]
        %v724 = vadd.f32 %v425, %v543
        %v725 = vadd.f32 %v426, %v547
        %v726 = vadd.f32 %v427, %v554
        %v727 = vadd.f32 %v428, %v558
        %v728 = vadd.f32 %v429, %v565
        %v729 = vadd.f32 %v430, %v569
        %v730 = vadd.f32 %v431, %v576
        %v731 = vadd.f32 %v432, %v580
        %v732 = vadd.f32 %v433, %v587
        %v733 = vadd.f32 %v434, %v591
        %v734 = vadd.f32 %v435, %v598
        %v735 = vadd.f32 %v436, %v602
        %v736 = vadd.f32 %v437, %v609
        %v737 = vadd.f32 %v438, %v613
        %v738 = vadd.f32 %v439, %v620
        %v739 = vadd.f32 %v440, %v624
        %v740 = vmax.f32 %v724, %v725
        %v741 = vrot.slane %v740, 4
        %v742 = vmax.f32 %v740, %v741
        %v743 = vrot.slane %v742, 2
        %v744 = vmax.f32 %v742, %v743
        %v745 = vrot.slane %v744, 1
        %v746 = vmax.f32 %v744, %v745
        %v747 = vmax.f32 %v726, %v727
        %v748 = vrot.slane %v747, 4
        %v749 = vmax.f32 %v747, %v748
        %v750 = vrot.slane %v749, 2
        %v751 = vmax.f32 %v749, %v750
        %v752 = vrot.slane %v751, 1
        %v753 = vmax.f32 %v751, %v752
        %v754 = vmax.f32 %v728, %v729
        %v755 = vrot.slane %v754, 4
        %v756 = vmax.f32 %v754, %v755
        %v757 = vrot.slane %v756, 2
        %v758 = vmax.f32 %v756, %v757
        %v759 = vrot.slane %v758, 1
        %v760 = vmax.f32 %v758, %v759
        %v761 = vmax.f32 %v730, %v731
        %v762 = vrot.slane %v761, 4
        %v763 = vmax.f32 %v761, %v762
        %v764 = vrot.slane %v763, 2
        %v765 = vmax.f32 %v763, %v764
        %v766 = vrot.slane %v765, 1
        %v767 = vmax.f32 %v765, %v766
        %v768 = vmax.f32 %v732, %v733
        %v769 = vrot.slane %v768, 4
        %v770 = vmax.f32 %v768, %v769
        %v771 = vrot.slane %v770, 2
        %v772 = vmax.f32 %v770, %v771
        %v773 = vrot.slane %v772, 1
        %v774 = vmax.f32 %v772, %v773
        %v775 = vmax.f32 %v734, %v735
        %v776 = vrot.slane %v775, 4
        %v777 = vmax.f32 %v775, %v776
        %v778 = vrot.slane %v777, 2
        %v779 = vmax.f32 %v777, %v778
        %v780 = vrot.slane %v779, 1
        %v781 = vmax.f32 %v779, %v780
        %v782 = vmax.f32 %v736, %v737
        %v783 = vrot.slane %v782, 4
        %v784 = vmax.f32 %v782, %v783
        %v785 = vrot.slane %v784, 2
        %v786 = vmax.f32 %v784, %v785
        %v787 = vrot.slane %v786, 1
        %v788 = vmax.f32 %v786, %v787
        %v789 = vmax.f32 %v738, %v739
        %v790 = vrot.slane %v789, 4
        %v791 = vmax.f32 %v789, %v790
        %v792 = vrot.slane %v791, 2
        %v793 = vmax.f32 %v791, %v792
        %v794 = vrot.slane %v793, 1
        %v795 = vmax.f32 %v793, %v794
        %v804 = vsel %vm706, %v753, %v746
        %v805 = vsel %vm708, %v760, %v804
        %v806 = vsel %vm710, %v767, %v805
        %v807 = vsel %vm712, %v774, %v806
        %v808 = vsel %vm714, %v781, %v807
        %v809 = vsel %vm716, %v788, %v808
        %v810 = vsel %vm718, %v795, %v809
        %v812 = vmax.f32 %v723, %v810
        %813 = vst [vmem:[#allocation3] sm:$0xff] %v812
        // Predicated region
        $region73: #{tpu_custom_call.1} parent=47 // pred_check
          %p814 = pneg %p403
        $region74: #{tpu_custom_call.1} parent=47 // pred_check_branch
          %816 = sbr.rel (%p814) target = $region76
        $region75: #{tpu_custom_call.1} parent=47 // pred_region
          %v817 = vld [vmem:[#allocation2] sm:$0xff]
          %v818 = vld [vmem:[#allocation9] sm:$0xff]
          %v819 = vld [vmem:[#allocation9 + $0x8] sm:$0xff]
          %v820 = vld [vmem:[#allocation9 + $0x10] sm:$0xff]
          %v821 = vld [vmem:[#allocation9 + $0x18] sm:$0xff]
          %v822 = vld [vmem:[#allocation9 + $0x20] sm:$0xff]
          %v823 = vld [vmem:[#allocation9 + $0x28] sm:$0xff]
          %v824 = vld [vmem:[#allocation9 + $0x30] sm:$0xff]
          %v825 = vld [vmem:[#allocation9 + $0x38] sm:$0xff]
          %v826 = vld [vmem:[#allocation9 + $0x40] sm:$0xff]
          %v827 = vld [vmem:[#allocation9 + $0x48] sm:$0xff]
          %v828 = vld [vmem:[#allocation9 + $0x50] sm:$0xff]
          %v829 = vld [vmem:[#allocation9 + $0x58] sm:$0xff]
          %v830 = vld [vmem:[#allocation9 + $0x60] sm:$0xff]
          %v831 = vld [vmem:[#allocation9 + $0x68] sm:$0xff]
          %v832 = vld [vmem:[#allocation9 + $0x70] sm:$0xff]
          %v833 = vld [vmem:[#allocation9 + $0x78] sm:$0xff]
          %v834 = vld [vmem:[#allocation3] sm:$0xff]
          %v835 = vld [vmem:[#allocation10] sm:$0xff]
          %v836 = vld [vmem:[#allocation10 + $0x8] sm:$0xff]
          %v837 = vld [vmem:[#allocation10 + $0x10] sm:$0xff]
          %v838 = vld [vmem:[#allocation10 + $0x18] sm:$0xff]
          %v839 = vld [vmem:[#allocation10 + $0x20] sm:$0xff]
          %v840 = vld [vmem:[#allocation10 + $0x28] sm:$0xff]
          %v841 = vld [vmem:[#allocation10 + $0x30] sm:$0xff]
          %v842 = vld [vmem:[#allocation10 + $0x38] sm:$0xff]
          %v843 = vld [vmem:[#allocation10 + $0x40] sm:$0xff]
          %v844 = vld [vmem:[#allocation10 + $0x48] sm:$0xff]
          %v845 = vld [vmem:[#allocation10 + $0x50] sm:$0xff]
          %v846 = vld [vmem:[#allocation10 + $0x58] sm:$0xff]
          %v847 = vld [vmem:[#allocation10 + $0x60] sm:$0xff]
          %v848 = vld [vmem:[#allocation10 + $0x68] sm:$0xff]
          %v849 = vld [vmem:[#allocation10 + $0x70] sm:$0xff]
          %v850 = vld [vmem:[#allocation10 + $0x78] sm:$0xff]
          %851 = vmatprep.subr.mxu0 0.0
          %852 = vmatpush1.msra.mxu0 %v835
          %853 = vmatprep.subr.mxu0 0.0
          %854 = vmatpush1.msra.mxu0 %v836
          %855 = vmatprep.subr.mxu0 0.0
          %856 = vmatpush1.msra.mxu0 %v837
          %857 = vmatprep.subr.mxu0 0.0
          %858 = vmatpush1.msra.mxu0 %v838
          %859 = vmatprep.subr.mxu0 0.0
          %860 = vmatpush1.msra.mxu0 %v839
          %861 = vmatprep.subr.mxu0 0.0
          %862 = vmatpush1.msra.mxu0 %v840
          %863 = vmatprep.subr.mxu0 0.0
          %864 = vmatpush1.msra.mxu0 %v841
          %865 = vmatprep.subr.mxu0 0.0
          %866 = vmatpush1.msra.mxu0 %v842
          %867 = vmatprep.subr.mxu0 0.0
          %868 = vmatpush1.msra.mxu0 %v843
          %869 = vmatprep.subr.mxu0 0.0
          %870 = vmatpush1.msra.mxu0 %v844
          %871 = vmatprep.subr.mxu0 0.0
          %872 = vmatpush1.msra.mxu0 %v845
          %873 = vmatprep.subr.mxu0 0.0
          %874 = vmatpush1.msra.mxu0 %v846
          %875 = vmatprep.subr.mxu0 0.0
          %876 = vmatpush1.msra.mxu0 %v847
          %877 = vmatprep.subr.mxu0 0.0
          %878 = vmatpush1.msra.mxu0 %v848
          %879 = vmatprep.subr.mxu0 0.0
          %880 = vmatpush1.msra.mxu0 %v849
          %881 = vmatprep.subr.mxu0 0.0
          %882 = vmatpush1.msra.mxu0 %v850
          %883 = vmatprep.subr.mxu0 0.0
          %884 = vmatpush1.msra.mxu0 0.0
          %885 = vmatprep.subr.mxu0 0.0
          %886 = vmatpush1.msra.mxu0 0.0
          %887 = vmatprep.subr.mxu0 0.0
          %888 = vmatpush1.msra.mxu0 0.0
          %889 = vmatprep.subr.mxu0 0.0
          %890 = vmatpush1.msra.mxu0 0.0
          %891 = vmatprep.subr.mxu0 0.0
          %892 = vmatpush1.msra.mxu0 0.0
          %893 = vmatprep.subr.mxu0 0.0
          %894 = vmatpush1.msra.mxu0 0.0
          %895 = vmatprep.subr.mxu0 0.0
          %896 = vmatpush1.msra.mxu0 0.0
          %897 = vmatprep.subr.mxu0 0.0
          %898 = vmatpush1.msra.mxu0 0.0
          %899 = vmatprep.subr.mxu0 0.0
          %900 = vmatpush1.msra.mxu0 0.0
          %901 = vmatprep.subr.mxu0 0.0
          %902 = vmatpush1.msra.mxu0 0.0
          %903 = vmatprep.subr.mxu0 0.0
          %904 = vmatpush1.msra.mxu0 0.0
          %905 = vmatprep.subr.mxu0 0.0
          %906 = vmatpush1.msra.mxu0 0.0
          %907 = vmatprep.subr.mxu0 0.0
          %908 = vmatpush1.msra.mxu0 0.0
          %909 = vmatprep.subr.mxu0 0.0
          %910 = vmatpush1.msra.mxu0 0.0
          %911 = vmatprep.subr.mxu0 0.0
          %912 = vmatpush1.msra.mxu0 0.0
          %913 = vmatprep.subr.mxu0 0.0
          %914 = vmatpush1.msra.mxu0 0.0
          %915 = vmatprep.mubr.f32.mxu0 0.0
          %916 = vmatmul.mubr.f32.gmra.mrb[0].mxu0 %v834
          %v917 = vpop.f32.mrb[0].mxu0
          %v918 = vadd.f32 0.0, %v917
          %v919 = vpop.f32.mrb[0].mxu0
          %920 = vdwg.mxu0
          %921 = vmatprep.subr.mxu0 0.0
          %922 = vmatpush1.msra.mxu0 %v818
          %923 = vmatprep.subr.mxu0 0.0
          %924 = vmatpush1.msra.mxu0 %v819
          %925 = vmatprep.subr.mxu0 0.0
          %926 = vmatpush1.msra.mxu0 %v820
          %927 = vmatprep.subr.mxu0 0.0
          %928 = vmatpush1.msra.mxu0 %v821
          %929 = vmatprep.subr.mxu0 0.0
          %930 = vmatpush1.msra.mxu0 %v822
          %931 = vmatprep.subr.mxu0 0.0
          %932 = vmatpush1.msra.mxu0 %v823
          %933 = vmatprep.subr.mxu0 0.0
          %934 = vmatpush1.msra.mxu0 %v824
          %935 = vmatprep.subr.mxu0 0.0
          %936 = vmatpush1.msra.mxu0 %v825
          %937 = vmatprep.subr.mxu0 0.0
          %938 = vmatpush1.msra.mxu0 %v826
          %939 = vmatprep.subr.mxu0 0.0
          %940 = vmatpush1.msra.mxu0 %v827
          %941 = vmatprep.subr.mxu0 0.0
          %942 = vmatpush1.msra.mxu0 %v828
          %943 = vmatprep.subr.mxu0 0.0
          %944 = vmatpush1.msra.mxu0 %v829
          %945 = vmatprep.subr.mxu0 0.0
          %946 = vmatpush1.msra.mxu0 %v830
          %947 = vmatprep.subr.mxu0 0.0
          %948 = vmatpush1.msra.mxu0 %v831
          %949 = vmatprep.subr.mxu0 0.0
          %950 = vmatpush1.msra.mxu0 %v832
          %951 = vmatprep.subr.mxu0 0.0
          %952 = vmatpush1.msra.mxu0 %v833
          %953 = vmatprep.subr.mxu0 0.0
          %954 = vmatpush1.msra.mxu0 0.0
          %955 = vmatprep.subr.mxu0 0.0
          %956 = vmatpush1.msra.mxu0 0.0
          %957 = vmatprep.subr.mxu0 0.0
          %958 = vmatpush1.msra.mxu0 0.0
          %959 = vmatprep.subr.mxu0 0.0
          %960 = vmatpush1.msra.mxu0 0.0
          %961 = vmatprep.subr.mxu0 0.0
          %962 = vmatpush1.msra.mxu0 0.0
          %963 = vmatprep.subr.mxu0 0.0
          %964 = vmatpush1.msra.mxu0 0.0
          %965 = vmatprep.subr.mxu0 0.0
          %966 = vmatpush1.msra.mxu0 0.0
          %967 = vmatprep.subr.mxu0 0.0
          %968 = vmatpush1.msra.mxu0 0.0
          %969 = vmatprep.subr.mxu0 0.0
          %970 = vmatpush1.msra.mxu0 0.0
          %971 = vmatprep.subr.mxu0 0.0
          %972 = vmatpush1.msra.mxu0 0.0
          %973 = vmatprep.subr.mxu0 0.0
          %974 = vmatpush1.msra.mxu0 0.0
          %975 = vmatprep.subr.mxu0 0.0
          %976 = vmatpush1.msra.mxu0 0.0
          %977 = vmatprep.subr.mxu0 0.0
          %978 = vmatpush1.msra.mxu0 0.0
          %979 = vmatprep.subr.mxu0 0.0
          %980 = vmatpush1.msra.mxu0 0.0
          %981 = vmatprep.subr.mxu0 0.0
          %982 = vmatpush1.msra.mxu0 0.0
          %983 = vmatprep.subr.mxu0 0.0
          %984 = vmatpush1.msra.mxu0 0.0
          %985 = vmatprep.mubr.f32.mxu0 0.0
          %986 = vmatmul.mubr.f32.gmra.mrb[0].mxu0 %v817
          %v987 = vpop.f32.mrb[0].mxu0
          %v988 = vadd.f32 %v918, %v987
          %v989 = vpop.f32.mrb[0].mxu0
          %990 = vdwg.mxu0
          %v991 = vld [vmem:[%s4] sm:$0x1]
          %v993 = vlaneseq
          %v994 = vshrl.u32 %v993, 7
          %v995 = vsub.s32 0, %v994
          %v996 = vrot.slane %v991, %v995
          %v998 = vadd.f32 %v988, %v996
          %v999 = vmax.f32 %v998, 0.0
          %v1000 = vld [vmem:[#allocation12] sm:$0xff]
          %v1001 = vld [vmem:[#allocation12 + $0x8] sm:$0xff]
          %v1002 = vld [vmem:[#allocation12 + $0x10] sm:$0xff]
          %v1003 = vld [vmem:[#allocation12 + $0x18] sm:$0xff]
          %v1004 = vld [vmem:[#allocation12 + $0x20] sm:$0xff]
          %v1005 = vld [vmem:[#allocation12 + $0x28] sm:$0xff]
          %v1006 = vld [vmem:[#allocation12 + $0x30] sm:$0xff]
          %v1007 = vld [vmem:[#allocation12 + $0x38] sm:$0xff]
          %v1008 = vld [vmem:[#allocation12 + $0x40] sm:$0xff]
          %v1009 = vld [vmem:[#allocation12 + $0x48] sm:$0xff]
          %v1010 = vld [vmem:[#allocation12 + $0x50] sm:$0xff]
          %v1011 = vld [vmem:[#allocation12 + $0x58] sm:$0xff]
          %v1012 = vld [vmem:[#allocation12 + $0x60] sm:$0xff]
          %v1013 = vld [vmem:[#allocation12 + $0x68] sm:$0xff]
          %v1014 = vld [vmem:[#allocation12 + $0x70] sm:$0xff]
          %v1015 = vld [vmem:[#allocation12 + $0x78] sm:$0xff]
          %v1016 = vld [vmem:[%s6] sm:$0x1]
          %v1018 = vlaneseq
          %v1019 = vshrl.u32 %v1018, 7
          %v1020 = vsub.s32 0, %v1019
          %v1021 = vrot.slane %v1016, %v1020
          %1023 = vmatprep.subr.mxu0 0.0
          %1024 = vmatpush1.msra.mxu0 %v1000
          %1025 = vmatprep.subr.mxu0 0.0
          %1026 = vmatpush1.msra.mxu0 %v1001
          %1027 = vmatprep.subr.mxu0 0.0
          %1028 = vmatpush1.msra.mxu0 %v1002
          %1029 = vmatprep.subr.mxu0 0.0
          %1030 = vmatpush1.msra.mxu0 %v1003
          %1031 = vmatprep.subr.mxu0 0.0
          %1032 = vmatpush1.msra.mxu0 %v1004
          %1033 = vmatprep.subr.mxu0 0.0
          %1034 = vmatpush1.msra.mxu0 %v1005
          %1035 = vmatprep.subr.mxu0 0.0
          %1036 = vmatpush1.msra.mxu0 %v1006
          %1037 = vmatprep.subr.mxu0 0.0
          %1038 = vmatpush1.msra.mxu0 %v1007
          %1039 = vmatprep.subr.mxu0 0.0
          %1040 = vmatpush1.msra.mxu0 %v1008
          %1041 = vmatprep.subr.mxu0 0.0
          %1042 = vmatpush1.msra.mxu0 %v1009
          %1043 = vmatprep.subr.mxu0 0.0
          %1044 = vmatpush1.msra.mxu0 %v1010
          %1045 = vmatprep.subr.mxu0 0.0
          %1046 = vmatpush1.msra.mxu0 %v1011
          %1047 = vmatprep.subr.mxu0 0.0
          %1048 = vmatpush1.msra.mxu0 %v1012
          %1049 = vmatprep.subr.mxu0 0.0
          %1050 = vmatpush1.msra.mxu0 %v1013
          %1051 = vmatprep.subr.mxu0 0.0
          %1052 = vmatpush1.msra.mxu0 %v1014
          %1053 = vmatprep.subr.mxu0 0.0
          %1054 = vmatpush1.msra.mxu0 %v1015
          %1055 = vmatprep.subr.mxu0 0.0
          %1056 = vmatpush1.msra.mxu0 0.0
          %1057 = vmatprep.subr.mxu0 0.0
          %1058 = vmatpush1.msra.mxu0 0.0
          %1059 = vmatprep.subr.mxu0 0.0
          %1060 = vmatpush1.msra.mxu0 0.0
          %1061 = vmatprep.subr.mxu0 0.0
          %1062 = vmatpush1.msra.mxu0 0.0
          %1063 = vmatprep.subr.mxu0 0.0
          %1064 = vmatpush1.msra.mxu0 0.0
          %1065 = vmatprep.subr.mxu0 0.0
          %1066 = vmatpush1.msra.mxu0 0.0
          %1067 = vmatprep.subr.mxu0 0.0
          %1068 = vmatpush1.msra.mxu0 0.0
          %1069 = vmatprep.subr.mxu0 0.0
          %1070 = vmatpush1.msra.mxu0 0.0
          %1071 = vmatprep.subr.mxu0 0.0
          %1072 = vmatpush1.msra.mxu0 0.0
          %1073 = vmatprep.subr.mxu0 0.0
          %1074 = vmatpush1.msra.mxu0 0.0
          %1075 = vmatprep.subr.mxu0 0.0
          %1076 = vmatpush1.msra.mxu0 0.0
          %1077 = vmatprep.subr.mxu0 0.0
          %1078 = vmatpush1.msra.mxu0 0.0
          %1079 = vmatprep.subr.mxu0 0.0
          %1080 = vmatpush1.msra.mxu0 0.0
          %1081 = vmatprep.subr.mxu0 0.0
          %1082 = vmatpush1.msra.mxu0 0.0
          %1083 = vmatprep.subr.mxu0 0.0
          %1084 = vmatpush1.msra.mxu0 0.0
          %1085 = vmatprep.subr.mxu0 0.0
          %1086 = vmatpush1.msra.mxu0 0.0
          %1087 = vmatprep.mubr.f32.mxu0 0.0
          %1088 = vmatmul.mubr.f32.gmra.mrb[0].mxu0 %v999
          %v1089 = vpop.f32.mrb[0].mxu0
          %v1090 = vadd.f32 %v1021, %v1089
          %v1091 = vpop.f32.mrb[0].mxu0
          %1092 = vdwg.mxu0
          %v1093 = vmax.f32 %v1090, 0.0
          %1094 = vst [vmem:[%s399] sm:$0xff] %v1093
        $region76: #{tpu_custom_call.1} parent=47 // pred_fallthru
          _
        %s1095 = sand.u32 %s209, 1
        %s1096 = scalar_lea.sflag [#allocation6], %s1095
        %s1097 = sand.u32 %s209, 1
        %s1098 = smul.addr %s1097, 8
        %s1099 = scalar_lea.vmem [#allocation13], %s1098
        // Predicated region
        $region77: #{tpu_custom_call.1} parent=47 // pred_check
          %p1100 = pneg %p219
        $region78: #{tpu_custom_call.1} parent=47 // pred_check_branch
          %1102 = sbr.rel (%p1100) target = $region80
        $region79: #{tpu_custom_call.1} parent=47 // pred_region
          %s1104 = ssub.s32 128, 128
          %1105 = vsyncadd %s1096, %s1104
          %s1106 = smul.addr %s32, 128
          %s1107 = scalar_lea.hbm %s7, %s1106
          %s1109 = sshll.u32 %s1099, 4
          %s1110 = int_to_ptr.vmem [resolvable:$true] %s1109
          %1112 = dma.vmem_to_hbm [thread:$0]  %s1110, 128, %s1107, %s1096
        $region80: #{tpu_custom_call.1} parent=47 // pred_fallthru
          _
      $region48: #{tpu_custom_call.1} parent=5 // pred_fallthru
        _
      %p1113 = scmp.le.s32.totalorder 2, %s23
      // Predicated region
      $region81: #{tpu_custom_call.1} parent=5 // pred_check
        %p1114 = pneg %p1113
      $region82: #{tpu_custom_call.1} parent=5 // pred_check_branch
        %1116 = sbr.rel (%p1114) target = $region84
      $region83: #{tpu_custom_call.1} parent=5 // pred_region
        %s1117 = ssub.s32 %s23, 2
        // Predicated region
        $region85: #{tpu_custom_call.1} parent=83 // pred_check
          %p1118 = pneg %p225
        $region86: #{tpu_custom_call.1} parent=83 // pred_check_branch
          %1120 = sbr.rel (%p1118) target = $region88
        $region87: #{tpu_custom_call.1} parent=83 // pred_region
          %s1121 = sand.u32 %s210, 1
          %s1122 = scalar_lea.sflag [#allocation6], %s1121
          %s1123 = sand.u32 %s210, 1
          %s1124 = smul.addr %s1123, 8
          %s1125 = scalar_lea.vmem [#allocation13], %s1124
          %1126 = dma.done %s1122, 128
        $region88: #{tpu_custom_call.1} parent=83 // pred_fallthru
          _
      $region84: #{tpu_custom_call.1} parent=5 // pred_fallthru
        _
    $region6: #{tpu_custom_call.1} parent=1 // loop_footer
      %s27 = sadd.s32 1, %s23
    $region7: #{tpu_custom_call.1} parent=1 // loop_footer_branch
      %22 = sbr.rel target = $region3
    $region8: #{tpu_custom_call.1} parent=1 // loop_exit
      _
    %1127 = vsyncpa [#allocation5], 1
    %s1128 = scalar_lea.sflag [#allocation5], 1
    %1129 = vsyncpa %s1128, 1
    %1130 = vsyncpa [#allocation8], 1
    %s1131 = scalar_lea.sflag [#allocation8], 1
    %1132 = vsyncpa %s1131, 1
    %1133 = vsyncpa [#allocation11], 1
    %1134 = vsyncpa [#allocation6], 1
    %s1135 = scalar_lea.sflag [#allocation6], 1
    %1136 = vsyncpa %s1135, 1

</llo_original>
